<compile_context>
chip_gen: v7x
topology: tpu7x:2x2x1
jax: 0.10.0
libtpu: 0.0.40
codegen_flags: <defaults>
</compile_context>

<pallas_src>
import jax
import jax.numpy as jnp
from jax import lax
from jax.experimental import pallas as pl
from jax.experimental.pallas import tpu as pltpu
import numpy as np


# ---------------------------------------------------------------------------
# Kernel
# ---------------------------------------------------------------------------
def sfe_kernel(p_ref, y_ref, wbig_ref, bbig_ref, w1a_ref, b1a_ref,
               w1b_ref, b1b_ref, wcr_ref, o_ref):
    """Processes Nb images per grid step, all in (channels, H*W) layout.

    p_ref : (Nb, 9*Cin, HW)  im2col patches (centre tap == x itself)
    y_ref : (Nb, C,     HW)  feature map y
    wbig  : (2C, 9*Cin)      rows [:C] = conv3x3 weight, rows [C:] = Wcx at
                             the centre tap only (x-part of the final 1x1)
    bbig  : (2C, 1)          [b3 ; bc]
    w1a/w1b/wcr : (C, C)     transposed 1x1 conv weights
    b1a/b1b     : (C, 1)
    o_ref : (Nb, C, HW)      output (NCHW once reshaped in the wrapper)
    """
    nb_blk = p_ref.shape[0]
    c = y_ref.shape[1]

    # Hoist all weight/bias loads out of the per-image loop.
    wbig = wbig_ref[...]
    bbig = bbig_ref[...]
    w1a = w1a_ref[...]
    b1a = b1a_ref[...]
    w1b = w1b_ref[...]
    b1b = b1b_ref[...]
    wcr = wcr_ref[...]
    cdt = wbig.dtype                       # compute dtype (f32 or bf16)

    for nb in range(nb_blk):
        p = p_ref[nb]                                   # (9*Cin, HW)
        yv = y_ref[nb].astype(jnp.float32)              # (C, HW)

        # conv3x3(x)+b3 and x@Wcx+bc in ONE MXU pass: (2C,9Cin)@(9Cin,HW).
        a = jnp.dot(wbig, p, preferred_element_type=jnp.float32) + bbig
        t = a[:c]                                       # conv3x3(x) + b3
        xc = a[c:]                                      # x @ Wcx + bc

        # 1x1 conv -> ReLU -> 1x1 conv (f32 accumulation).
        t = jnp.dot(w1a, t.astype(cdt),
                    preferred_element_type=jnp.float32) + b1a
        t = jnp.maximum(t, 0.0)
        t = jnp.dot(w1b, t.astype(cdt),
                    preferred_element_type=jnp.float32) + b1b

        r = t * yv                                      # enconv(x) * y
        out = xc + jnp.dot(wcr, r.astype(cdt),
                           preferred_element_type=jnp.float32) + yv
        o_ref[nb] = out.astype(o_ref.dtype)             # lane-dense store


# ---------------------------------------------------------------------------
# Wrapper
# ---------------------------------------------------------------------------
def _im2col_nchw(x):
    """(N, Cin, H, W) -> (N, 9*Cin, H*W) patch matrix (SAME padding, 3x3)."""
    n, cin, h, w = x.shape
    xp = jnp.pad(x, ((0, 0), (0, 0), (1, 1), (1, 1)))
    cols = []
    for dh in range(3):
        for dw in range(3):
            cols.append(xp[:, :, dh:dh + h, dw:dw + w])
    p = jnp.stack(cols, axis=1)                 # (N, 9, Cin, H, W)
    return p.reshape(n, 9 * cin, h * w)


def _pick_batch_block(n, cin, c, hw, itemsize, budget_bytes=24 * 1024 * 1024):
    """Largest Nb dividing N whose double-buffered blocks fit the VMEM budget
    (budget chosen conservatively so the tiling also works on v7x's 64 MiB)."""
    per_img = 2 * hw * (9 * cin + c) * itemsize + 2 * hw * c * 4  # in + out(f32)
    nb = max(1, min(n, budget_bytes // max(per_img, 1)))
    while n % nb:
        nb -= 1
    return nb


def sfe_forward(x_nchw, y_nchw, params, *, compute_dtype=jnp.float32):
    """x: (N, Cin, H, W), y: (N, C, H, W) -> (N, C, H, W), float32."""
    n, cin, h, w = x_nchw.shape
    c = y_nchw.shape[1]
    hw = h * w

    w3, b3, w1a, b1a, w1b, b1b, wcx, wcr, bc = params

    # --- fold conv3x3 and the x-part of the final 1x1 into one weight ------
    w3_t = jnp.transpose(w3, (3, 0, 1, 2)).reshape(c, 9 * cin)   # (C, 9Cin)
    wcx_big = jnp.zeros((c, 9 * cin), w3.dtype)
    wcx_big = wcx_big.at[:, 4 * cin:5 * cin].set(wcx.T)          # centre tap
    wbig = jnp.concatenate([w3_t, wcx_big], axis=0).astype(compute_dtype)
    bbig = jnp.concatenate([b3.reshape(c, 1), bc.reshape(c, 1)],
                           axis=0).astype(jnp.float32)

    w1a_t = w1a.T.astype(compute_dtype)
    w1b_t = w1b.T.astype(compute_dtype)
    wcr_t = wcr.T.astype(compute_dtype)
    b1a_c = b1a.reshape(c, 1).astype(jnp.float32)
    b1b_c = b1b.reshape(c, 1).astype(jnp.float32)

    # --- activations in lane-dense (channels, H*W) layout -------------------
    p = _im2col_nchw(x_nchw).astype(compute_dtype)    # (N, 9*Cin, HW)
    yf = y_nchw.reshape(n, c, hw).astype(compute_dtype)

    nb = _pick_batch_block(n, cin, c, hw, jnp.dtype(compute_dtype).itemsize)

    def const_spec(shape):
        return pl.BlockSpec(shape, lambda i, _nd=len(shape): (0,) * _nd)

    out = pl.pallas_call(
        sfe_kernel,
        out_shape=jax.ShapeDtypeStruct((n, c, hw), jnp.float32),
        grid_spec=pltpu.PrefetchScalarGridSpec(
            num_scalar_prefetch=0,
            grid=(n // nb,),
            in_specs=[
                pl.BlockSpec((nb, 9 * cin, hw), lambda i: (i, 0, 0)),
                pl.BlockSpec((nb, c, hw), lambda i: (i, 0, 0)),
                const_spec(wbig.shape), const_spec(bbig.shape),
                const_spec(w1a_t.shape), const_spec(b1a_c.shape),
                const_spec(w1b_t.shape), const_spec(b1b_c.shape),
                const_spec(wcr_t.shape),
            ],
            out_specs=pl.BlockSpec((nb, c, hw), lambda i: (i, 0, 0)),
        ),
        compiler_params=pltpu.CompilerParams(
            dimension_semantics=("parallel",)),
    )(p, yf, wbig, bbig, w1a_t, b1a_c, w1b_t, b1b_c, wcr_t)

    return out.reshape(n, c, h, w)


# ---------------------------------------------------------------------------
# Pure-JAX/XLA reference (independent of the kernel's weight folding)
# ---------------------------------------------------------------------------
def sfe_reference(x_nchw, y_nchw, params):
    w3, b3, w1a, b1a, w1b, b1b, wcx, wcr, bc = params
    xn = jnp.transpose(x_nchw, (0, 2, 3, 1))
    yn = jnp.transpose(y_nchw, (0, 2, 3, 1))
    r = lax.conv_general_dilated(
        xn, w3, window_strides=(1, 1), padding='SAME',
        dimension_numbers=('NHWC', 'HWIO', 'NHWC')) + b3
    r = jnp.einsum('nhwc,cd->nhwd', r, w1a) + b1a
    r = jnp.maximum(r, 0.0)
    r = jnp.einsum('nhwc,cd->nhwd', r, w1b) + b1b
    r = r * yn
    out = (jnp.einsum('nhwc,cd->nhwd', xn, wcx)
           + jnp.einsum('nhwc,cd->nhwd', r, wcr) + bc + yn)
    return jnp.transpose(out, (0, 3, 1, 2))


def init_params(key, image_channel, channel):
    ks = jax.random.split(key, 10)
    s = 0.1
    w3 = jax.random.normal(ks[0], (3, 3, image_channel, channel), jnp.float32) * s
    b3 = jax.random.normal(ks[1], (1, channel), jnp.float32) * s
    w1a = jax.random.normal(ks[2], (channel, channel), jnp.float32) * s
    b1a = jax.random.normal(ks[3], (1, channel), jnp.float32) * s
    w1b = jax.random.normal(ks[4], (channel, channel), jnp.float32) * s
    b1b = jax.random.normal(ks[5], (1, channel), jnp.float32) * s
    # final 1x1 conv over planes = image_channel + channel, split x / res parts
    wcx = jax.random.normal(ks[6], (image_channel, channel), jnp.float32) * s
    wcr = jax.random.normal(ks[7], (channel, channel), jnp.float32) * s
    bc = jax.random.normal(ks[8], (1, channel), jnp.float32) * s
    return (w3, b3, w1a, b1a, w1b, b1b, wcx, wcr, bc)


if __name__ == "__main__":
    N, image_channel, channel, H, W = 2, 4, 32, 16, 16

    key = jax.random.PRNGKey(0)
    kx, ky, kp = jax.random.split(key, 3)
    x = jax.random.normal(kx, (N, image_channel, H, W), jnp.float32)
    y = jax.random.normal(ky, (N, channel, H, W), jnp.float32)
    params = init_params(kp, image_channel, channel)

    ref = jax.block_until_ready(sfe_reference(x, y, params))

    # float32 path (exact check).
    out_f32 = jax.block_until_ready(
        sfe_forward(x, y, params, compute_dtype=jnp.float32))
    np.testing.assert_allclose(np.asarray(out_f32), np.asarray(ref),
                               rtol=1e-4, atol=1e-4)

    # bf16 MXU path (v6e/v7x perf mode), f32 accumulation — loose tolerance.
    out_bf16 = jax.block_until_ready(
        sfe_forward(x, y, params, compute_dtype=jnp.bfloat16))
    np.testing.assert_allclose(np.asarray(out_bf16), np.asarray(ref),
                               rtol=5e-2, atol=1e-1)

    print("KERNEL_OK")
</pallas_src>

<mosaic_0001>
module attributes {stable_mosaic.version = 11 : i64} {
  func.func @sfe_kernel(%arg0: i32, %arg1: memref<2x36x256xf32, #tpu.memory_space<vmem>>, %arg2: memref<2x32x256xf32, #tpu.memory_space<vmem>>, %arg3: memref<64x36xf32, #tpu.memory_space<vmem>>, %arg4: memref<64x1xf32, #tpu.memory_space<vmem>>, %arg5: memref<32x32xf32, #tpu.memory_space<vmem>>, %arg6: memref<32x1xf32, #tpu.memory_space<vmem>>, %arg7: memref<32x32xf32, #tpu.memory_space<vmem>>, %arg8: memref<32x1xf32, #tpu.memory_space<vmem>>, %arg9: memref<32x32xf32, #tpu.memory_space<vmem>>, %arg10: memref<2x32x256xf32, #tpu.memory_space<vmem>>) attributes {dimension_semantics = [#tpu.dimension_semantics<parallel>], iteration_bounds = array<i64: 1>, scalar_prefetch = 0 : i64, scratch_operands = 0 : i64, tpu.core_type = #tpu.core_type<tc>, window_params = [{transform_indices = @transform_0, window_bounds = array<i64: 2, 36, 256>}, {transform_indices = @transform_1, window_bounds = array<i64: 2, 32, 256>}, {pipeline_mode = #tpu.pipeline_mode<synchronous>, transform_indices = @transform_2, window_bounds = array<i64: 64, 36>}, {pipeline_mode = #tpu.pipeline_mode<synchronous>, transform_indices = @transform_3, window_bounds = array<i64: 64, 1>}, {pipeline_mode = #tpu.pipeline_mode<synchronous>, transform_indices = @transform_4, window_bounds = array<i64: 32, 32>}, {pipeline_mode = #tpu.pipeline_mode<synchronous>, transform_indices = @transform_5, window_bounds = array<i64: 32, 1>}, {pipeline_mode = #tpu.pipeline_mode<synchronous>, transform_indices = @transform_6, window_bounds = array<i64: 32, 32>}, {pipeline_mode = #tpu.pipeline_mode<synchronous>, transform_indices = @transform_7, window_bounds = array<i64: 32, 1>}, {pipeline_mode = #tpu.pipeline_mode<synchronous>, transform_indices = @transform_8, window_bounds = array<i64: 32, 32>}, {transform_indices = @transform_9, window_bounds = array<i64: 2, 32, 256>}]} {
    %c0 = arith.constant 0 : index
    %c0_0 = arith.constant 0 : index
    %0 = vector.load %arg3[%c0, %c0_0] : memref<64x36xf32, #tpu.memory_space<vmem>>, vector<64x36xf32>
    %c0_1 = arith.constant 0 : index
    %c0_2 = arith.constant 0 : index
    %1 = vector.load %arg4[%c0_1, %c0_2] : memref<64x1xf32, #tpu.memory_space<vmem>>, vector<64x1xf32>
    %c0_3 = arith.constant 0 : index
    %c0_4 = arith.constant 0 : index
    %2 = vector.load %arg5[%c0_3, %c0_4] : memref<32x32xf32, #tpu.memory_space<vmem>>, vector<32x32xf32>
    %c0_5 = arith.constant 0 : index
    %c0_6 = arith.constant 0 : index
    %3 = vector.load %arg6[%c0_5, %c0_6] : memref<32x1xf32, #tpu.memory_space<vmem>>, vector<32x1xf32>
    %c0_7 = arith.constant 0 : index
    %c0_8 = arith.constant 0 : index
    %4 = vector.load %arg7[%c0_7, %c0_8] : memref<32x32xf32, #tpu.memory_space<vmem>>, vector<32x32xf32>
    %c0_9 = arith.constant 0 : index
    %c0_10 = arith.constant 0 : index
    %5 = vector.load %arg8[%c0_9, %c0_10] : memref<32x1xf32, #tpu.memory_space<vmem>>, vector<32x1xf32>
    %c0_11 = arith.constant 0 : index
    %c0_12 = arith.constant 0 : index
    %6 = vector.load %arg9[%c0_11, %c0_12] : memref<32x32xf32, #tpu.memory_space<vmem>>, vector<32x32xf32>
    %c0_13 = arith.constant 0 : index
    %c0_14 = arith.constant 0 : index
    %c0_15 = arith.constant 0 : index
    %7 = vector.load %arg1[%c0_13, %c0_14, %c0_15] : memref<2x36x256xf32, #tpu.memory_space<vmem>>, vector<1x36x256xf32>
    %8 = vector.shape_cast %7 : vector<1x36x256xf32> to vector<36x256xf32>
    %c0_16 = arith.constant 0 : index
    %c0_17 = arith.constant 0 : index
    %c0_18 = arith.constant 0 : index
    %9 = vector.load %arg2[%c0_16, %c0_17, %c0_18] : memref<2x32x256xf32, #tpu.memory_space<vmem>>, vector<1x32x256xf32>
    %10 = vector.shape_cast %9 : vector<1x32x256xf32> to vector<32x256xf32>
    %cst = arith.constant dense<0.000000e+00> : vector<64x256xf32>
    %11 = tpu.matmul %0, %8, %cst {dimension_numbers = #tpu.dot_dimension_numbers<[1], [0], [0], [1], [0, 0, 1, 1], [], []>} : vector<64x36xf32>, vector<36x256xf32>, vector<64x256xf32> -> vector<64x256xf32>
    %12 = vector.broadcast %1 : vector<64x1xf32> to vector<64x256xf32>
    %13 = arith.addf %11, %12 : vector<64x256xf32>
    %14 = vector.extract_strided_slice %13 {offsets = [0, 0], sizes = [32, 256], strides = [1, 1]} : vector<64x256xf32> to vector<32x256xf32>
    %15 = vector.extract_strided_slice %13 {offsets = [32, 0], sizes = [32, 256], strides = [1, 1]} : vector<64x256xf32> to vector<32x256xf32>
    %cst_19 = arith.constant dense<0.000000e+00> : vector<32x256xf32>
    %16 = tpu.matmul %2, %14, %cst_19 {dimension_numbers = #tpu.dot_dimension_numbers<[1], [0], [0], [1], [0, 0, 1, 1], [], []>} : vector<32x32xf32>, vector<32x256xf32>, vector<32x256xf32> -> vector<32x256xf32>
    %17 = vector.broadcast %3 : vector<32x1xf32> to vector<32x256xf32>
    %18 = arith.addf %16, %17 : vector<32x256xf32>
    %cst_20 = arith.constant 0.000000e+00 : f32
    %19 = vector.broadcast %cst_20 : f32 to vector<32x256xf32>
    %20 = arith.maximumf %18, %19 : vector<32x256xf32>
    %cst_21 = arith.constant dense<0.000000e+00> : vector<32x256xf32>
    %21 = tpu.matmul %4, %20, %cst_21 {dimension_numbers = #tpu.dot_dimension_numbers<[1], [0], [0], [1], [0, 0, 1, 1], [], []>} : vector<32x32xf32>, vector<32x256xf32>, vector<32x256xf32> -> vector<32x256xf32>
    %22 = vector.broadcast %5 : vector<32x1xf32> to vector<32x256xf32>
    %23 = arith.addf %21, %22 : vector<32x256xf32>
    %24 = arith.mulf %23, %10 : vector<32x256xf32>
    %cst_22 = arith.constant dense<0.000000e+00> : vector<32x256xf32>
    %25 = tpu.matmul %6, %24, %cst_22 {dimension_numbers = #tpu.dot_dimension_numbers<[1], [0], [0], [1], [0, 0, 1, 1], [], []>} : vector<32x32xf32>, vector<32x256xf32>, vector<32x256xf32> -> vector<32x256xf32>
    %26 = arith.addf %15, %25 : vector<32x256xf32>
    %27 = arith.addf %26, %10 : vector<32x256xf32>
    %c0_23 = arith.constant 0 : index
    %c0_24 = arith.constant 0 : index
    %c0_25 = arith.constant 0 : index
    %28 = vector.load %arg10[%c0_23, %c0_24, %c0_25] : memref<2x32x256xf32, #tpu.memory_space<vmem>>, vector<1x32x256xf32>
    %29 = vector.shape_cast %28 : vector<1x32x256xf32> to vector<32x256xf32>
    %30 = vector.shape_cast %27 : vector<32x256xf32> to vector<1x32x256xf32>
    tpu.vector_store %arg10[%c0_23, %c0_24, %c0_25], %30 {strides = array<i32>} : memref<2x32x256xf32, #tpu.memory_space<vmem>>, vector<1x32x256xf32>,
    %c1 = arith.constant 1 : index
    %c0_26 = arith.constant 0 : index
    %c0_27 = arith.constant 0 : index
    %31 = vector.load %arg1[%c1, %c0_26, %c0_27] : memref<2x36x256xf32, #tpu.memory_space<vmem>>, vector<1x36x256xf32>
    %32 = vector.shape_cast %31 : vector<1x36x256xf32> to vector<36x256xf32>
    %c1_28 = arith.constant 1 : index
    %c0_29 = arith.constant 0 : index
    %c0_30 = arith.constant 0 : index
    %33 = vector.load %arg2[%c1_28, %c0_29, %c0_30] : memref<2x32x256xf32, #tpu.memory_space<vmem>>, vector<1x32x256xf32>
    %34 = vector.shape_cast %33 : vector<1x32x256xf32> to vector<32x256xf32>
    %cst_31 = arith.constant dense<0.000000e+00> : vector<64x256xf32>
    %35 = tpu.matmul %0, %32, %cst_31 {dimension_numbers = #tpu.dot_dimension_numbers<[1], [0], [0], [1], [0, 0, 1, 1], [], []>} : vector<64x36xf32>, vector<36x256xf32>, vector<64x256xf32> -> vector<64x256xf32>
    %36 = vector.broadcast %1 : vector<64x1xf32> to vector<64x256xf32>
    %37 = arith.addf %35, %36 : vector<64x256xf32>
    %38 = vector.extract_strided_slice %37 {offsets = [0, 0], sizes = [32, 256], strides = [1, 1]} : vector<64x256xf32> to vector<32x256xf32>
    %39 = vector.extract_strided_slice %37 {offsets = [32, 0], sizes = [32, 256], strides = [1, 1]} : vector<64x256xf32> to vector<32x256xf32>
    %cst_32 = arith.constant dense<0.000000e+00> : vector<32x256xf32>
    %40 = tpu.matmul %2, %38, %cst_32 {dimension_numbers = #tpu.dot_dimension_numbers<[1], [0], [0], [1], [0, 0, 1, 1], [], []>} : vector<32x32xf32>, vector<32x256xf32>, vector<32x256xf32> -> vector<32x256xf32>
    %41 = vector.broadcast %3 : vector<32x1xf32> to vector<32x256xf32>
    %42 = arith.addf %40, %41 : vector<32x256xf32>
    %cst_33 = arith.constant 0.000000e+00 : f32
    %43 = vector.broadcast %cst_33 : f32 to vector<32x256xf32>
    %44 = arith.maximumf %42, %43 : vector<32x256xf32>
    %cst_34 = arith.constant dense<0.000000e+00> : vector<32x256xf32>
    %45 = tpu.matmul %4, %44, %cst_34 {dimension_numbers = #tpu.dot_dimension_numbers<[1], [0], [0], [1], [0, 0, 1, 1], [], []>} : vector<32x32xf32>, vector<32x256xf32>, vector<32x256xf32> -> vector<32x256xf32>
    %46 = vector.broadcast %5 : vector<32x1xf32> to vector<32x256xf32>
    %47 = arith.addf %45, %46 : vector<32x256xf32>
    %48 = arith.mulf %47, %34 : vector<32x256xf32>
    %cst_35 = arith.constant dense<0.000000e+00> : vector<32x256xf32>
    %49 = tpu.matmul %6, %48, %cst_35 {dimension_numbers = #tpu.dot_dimension_numbers<[1], [0], [0], [1], [0, 0, 1, 1], [], []>} : vector<32x32xf32>, vector<32x256xf32>, vector<32x256xf32> -> vector<32x256xf32>
    %50 = arith.addf %39, %49 : vector<32x256xf32>
    %51 = arith.addf %50, %34 : vector<32x256xf32>
    %c1_36 = arith.constant 1 : index
    %c0_37 = arith.constant 0 : index
    %c0_38 = arith.constant 0 : index
    %52 = vector.load %arg10[%c1_36, %c0_37, %c0_38] : memref<2x32x256xf32, #tpu.memory_space<vmem>>, vector<1x32x256xf32>
    %53 = vector.shape_cast %52 : vector<1x32x256xf32> to vector<32x256xf32>
    %54 = vector.shape_cast %51 : vector<32x256xf32> to vector<1x32x256xf32>
    tpu.vector_store %arg10[%c1_36, %c0_37, %c0_38], %54 {strides = array<i32>} : memref<2x32x256xf32, #tpu.memory_space<vmem>>, vector<1x32x256xf32>,
    return
  }
  func.func @transform_0(%arg0: i32) -> (i32, i32, i32) {
    %c0_i32 = arith.constant 0 : i32
    %c0_i32_0 = arith.constant 0 : i32
    %c0_i32_1 = arith.constant 0 : i32
    return %arg0, %c0_i32, %c0_i32_0 : i32, i32, i32
  }
  func.func @transform_1(%arg0: i32) -> (i32, i32, i32) {
    %c0_i32 = arith.constant 0 : i32
    %c0_i32_0 = arith.constant 0 : i32
    %c0_i32_1 = arith.constant 0 : i32
    return %arg0, %c0_i32, %c0_i32_0 : i32, i32, i32
  }
  func.func @transform_2(%arg0: i32) -> (i32, i32) {
    %c0_i32 = arith.constant 0 : i32
    %c0_i32_0 = arith.constant 0 : i32
    %c0_i32_1 = arith.constant 0 : i32
    return %c0_i32, %c0_i32_0 : i32, i32
  }
  func.func @transform_3(%arg0: i32) -> (i32, i32) {
    %c0_i32 = arith.constant 0 : i32
    %c0_i32_0 = arith.constant 0 : i32
    %c0_i32_1 = arith.constant 0 : i32
    return %c0_i32, %c0_i32_0 : i32, i32
  }
  func.func @transform_4(%arg0: i32) -> (i32, i32) {
    %c0_i32 = arith.constant 0 : i32
    %c0_i32_0 = arith.constant 0 : i32
    %c0_i32_1 = arith.constant 0 : i32
    return %c0_i32, %c0_i32_0 : i32, i32
  }
  func.func @transform_5(%arg0: i32) -> (i32, i32) {
    %c0_i32 = arith.constant 0 : i32
    %c0_i32_0 = arith.constant 0 : i32
    %c0_i32_1 = arith.constant 0 : i32
    return %c0_i32, %c0_i32_0 : i32, i32
  }
  func.func @transform_6(%arg0: i32) -> (i32, i32) {
    %c0_i32 = arith.constant 0 : i32
    %c0_i32_0 = arith.constant 0 : i32
    %c0_i32_1 = arith.constant 0 : i32
    return %c0_i32, %c0_i32_0 : i32, i32
  }
  func.func @transform_7(%arg0: i32) -> (i32, i32) {
    %c0_i32 = arith.constant 0 : i32
    %c0_i32_0 = arith.constant 0 : i32
    %c0_i32_1 = arith.constant 0 : i32
    return %c0_i32, %c0_i32_0 : i32, i32
  }
  func.func @transform_8(%arg0: i32) -> (i32, i32) {
    %c0_i32 = arith.constant 0 : i32
    %c0_i32_0 = arith.constant 0 : i32
    %c0_i32_1 = arith.constant 0 : i32
    return %c0_i32, %c0_i32_0 : i32, i32
  }
  func.func @transform_9(%arg0: i32) -> (i32, i32, i32) {
    %c0_i32 = arith.constant 0 : i32
    %c0_i32_0 = arith.constant 0 : i32
    %c0_i32_1 = arith.constant 0 : i32
    return %arg0, %c0_i32, %c0_i32_0 : i32, i32, i32
  }
}

</mosaic_0001>

<llo_original>
// kernel: tpu_custom_call.1
$region0: #{tpu_custom_call.1}
  #allocation0 [shape = 'u32[]', space=smem, size = 0x4, offset = 0x4, fixed_abs, tag = 'smem constant byte address 0x4 - core index']
  #allocation1 [shape = 'u32[144,128]{1,0:T(1,128)}', space=vmem, size = 0x12000, scoped, tag = 'internal scratch']
  %s0 = inlined_call_operand.vmem [shape: f32[2,36,256], index: 0, kind: input, shape index: {}]
  %s1 = inlined_call_operand.vmem [shape: f32[2,32,256], index: 1, kind: input, shape index: {}]
  %s2 = inlined_call_operand.vmem [shape: f32[64,36], index: 2, kind: input, shape index: {}]
  %s3 = inlined_call_operand.vmem [shape: f32[64,1], index: 3, kind: input, shape index: {}]
  %s4 = inlined_call_operand.vmem [shape: f32[32,32], index: 4, kind: input, shape index: {}]
  %s5 = inlined_call_operand.vmem [shape: f32[32,1], index: 5, kind: input, shape index: {}]
  %s6 = inlined_call_operand.vmem [shape: f32[32,32], index: 6, kind: input, shape index: {}]
  %s7 = inlined_call_operand.vmem [shape: f32[32,1], index: 7, kind: input, shape index: {}]
  %s8 = inlined_call_operand.vmem [shape: f32[32,32], index: 8, kind: input, shape index: {}]
  %s9 = inlined_call_operand.hbm [shape: f32[2,32,256], index: 9, kind: output, shape index: {}]
  %s10 = sld [smem:[#allocation0]]
  $region46: #{tpu_custom_call.1} parent=0
    _
  %s12 = ssub.s32 1, %s10
  %s13 = scalar_select 0, %s12, %s10
  $region1: #{tpu_custom_call.1} parent=0
    #allocation2 [shape = 'u8[65536]{0}', space=vmem, size = 0x10000, scoped, tag = 'output window, operand 0, single buffered']
    #allocation3 [shape = 's32[1]{0}', space=sflag, size = 0x4, scoped, tag = 'scoped memory for tpu_custom_call.1']
    %14 = vsyncpa [#allocation3], 0
    // Predicated region
    $region2: #{tpu_custom_call.1} parent=1 // pred_check
      _
    $region3: #{tpu_custom_call.1} parent=1 // pred_check_branch
      %16 = sbr.rel (0) target = $region5
    $region4: #{tpu_custom_call.1} parent=1 // pred_region
      _
    $region5: #{tpu_custom_call.1} parent=1 // pred_fallthru
      _
    // Predicated region
    $region6: #{tpu_custom_call.1} parent=1 // pred_check
      _
    $region7: #{tpu_custom_call.1} parent=1 // pred_check_branch
      %18 = sbr.rel (0) target = $region9
    $region8: #{tpu_custom_call.1} parent=1 // pred_region
      _
    $region9: #{tpu_custom_call.1} parent=1 // pred_fallthru
      _
    // Predicated region
    $region10: #{tpu_custom_call.1} parent=1 // pred_check
      _
    $region11: #{tpu_custom_call.1} parent=1 // pred_check_branch
      %20 = sbr.rel (0) target = $region13
    $region12: #{tpu_custom_call.1} parent=1 // pred_region
      _
    $region13: #{tpu_custom_call.1} parent=1 // pred_fallthru
      _
    // Predicated region
    $region14: #{tpu_custom_call.1} parent=1 // pred_check
      _
    $region15: #{tpu_custom_call.1} parent=1 // pred_check_branch
      %22 = sbr.rel (0) target = $region17
    $region16: #{tpu_custom_call.1} parent=1 // pred_region
      _
    $region17: #{tpu_custom_call.1} parent=1 // pred_fallthru
      _
    // Predicated region
    $region18: #{tpu_custom_call.1} parent=1 // pred_check
      _
    $region19: #{tpu_custom_call.1} parent=1 // pred_check_branch
      %24 = sbr.rel (0) target = $region21
    $region20: #{tpu_custom_call.1} parent=1 // pred_region
      _
    $region21: #{tpu_custom_call.1} parent=1 // pred_fallthru
      _
    // Predicated region
    $region22: #{tpu_custom_call.1} parent=1 // pred_check
      _
    $region23: #{tpu_custom_call.1} parent=1 // pred_check_branch
      %26 = sbr.rel (0) target = $region25
    $region24: #{tpu_custom_call.1} parent=1 // pred_region
      _
    $region25: #{tpu_custom_call.1} parent=1 // pred_fallthru
      _
    // Predicated region
    $region26: #{tpu_custom_call.1} parent=1 // pred_check
      _
    $region27: #{tpu_custom_call.1} parent=1 // pred_check_branch
      %28 = sbr.rel (0) target = $region29
    $region28: #{tpu_custom_call.1} parent=1 // pred_region
      _
    $region29: #{tpu_custom_call.1} parent=1 // pred_fallthru
      _
    // Predicated region
    $region30: #{tpu_custom_call.1} parent=1 // pred_check
      _
    $region31: #{tpu_custom_call.1} parent=1 // pred_check_branch
      %30 = sbr.rel (0) target = $region33
    $region32: #{tpu_custom_call.1} parent=1 // pred_region
      _
    $region33: #{tpu_custom_call.1} parent=1 // pred_fallthru
      _
    // Predicated region
    $region34: #{tpu_custom_call.1} parent=1 // pred_check
      _
    $region35: #{tpu_custom_call.1} parent=1 // pred_check_branch
      %32 = sbr.rel (0) target = $region37
    $region36: #{tpu_custom_call.1} parent=1 // pred_region
      _
    $region37: #{tpu_custom_call.1} parent=1 // pred_fallthru
      _
    %v33 = vld [vmem:[%s2] sm:$0xff]
    %v34 = vld [vmem:[%s2 + $0x8] sm:$0xff]
    %v35 = vld [vmem:[%s2 + $0x10] sm:$0xff]
    %v36 = vld [vmem:[%s2 + $0x18] sm:$0xff]
    %v37 = vld [vmem:[%s2 + $0x20] sm:$0xff]
    %v38 = vld [vmem:[%s2 + $0x28] sm:$0xff]
    %v39 = vld [vmem:[%s2 + $0x30] sm:$0xff]
    %v40 = vld [vmem:[%s2 + $0x38] sm:$0xff]
    %v41 = vld [vmem:[%s3] sm:$0xff]
    %v42 = vld [vmem:[%s3 + $0x8] sm:$0xff]
    %v43 = vld [vmem:[%s3 + $0x10] sm:$0xff]
    %v44 = vld [vmem:[%s3 + $0x18] sm:$0xff]
    %v45 = vld [vmem:[%s3 + $0x20] sm:$0xff]
    %v46 = vld [vmem:[%s3 + $0x28] sm:$0xff]
    %v47 = vld [vmem:[%s3 + $0x30] sm:$0xff]
    %v48 = vld [vmem:[%s3 + $0x38] sm:$0xff]
    %v49 = vld [vmem:[%s4] sm:$0xff]
    %v50 = vld [vmem:[%s4 + $0x8] sm:$0xff]
    %v51 = vld [vmem:[%s4 + $0x10] sm:$0xff]
    %v52 = vld [vmem:[%s4 + $0x18] sm:$0xff]
    %v53 = vld [vmem:[%s5] sm:$0xff]
    %v54 = vld [vmem:[%s5 + $0x8] sm:$0xff]
    %v55 = vld [vmem:[%s5 + $0x10] sm:$0xff]
    %v56 = vld [vmem:[%s5 + $0x18] sm:$0xff]
    %v57 = vld [vmem:[%s6] sm:$0xff]
    %v58 = vld [vmem:[%s6 + $0x8] sm:$0xff]
    %v59 = vld [vmem:[%s6 + $0x10] sm:$0xff]
    %v60 = vld [vmem:[%s6 + $0x18] sm:$0xff]
    %v61 = vld [vmem:[%s7] sm:$0xff]
    %v62 = vld [vmem:[%s7 + $0x8] sm:$0xff]
    %v63 = vld [vmem:[%s7 + $0x10] sm:$0xff]
    %v64 = vld [vmem:[%s7 + $0x18] sm:$0xff]
    %v65 = vld [vmem:[%s8] sm:$0xff]
    %v66 = vld [vmem:[%s8 + $0x8] sm:$0xff]
    %v67 = vld [vmem:[%s8 + $0x10] sm:$0xff]
    %v68 = vld [vmem:[%s8 + $0x18] sm:$0xff]
    %v69 = vld [vmem:[%s0] sm:$0xff]
    %v70 = vld [vmem:[%s0 + $0x8] sm:$0xff]
    %v71 = vld [vmem:[%s0 + $0x10] sm:$0xff]
    %v72 = vld [vmem:[%s0 + $0x18] sm:$0xff]
    %v73 = vld [vmem:[%s0 + $0x20] sm:$0xff]
    %v74 = vld [vmem:[%s0 + $0x28] sm:$0xff]
    %v75 = vld [vmem:[%s0 + $0x30] sm:$0xff]
    %v76 = vld [vmem:[%s0 + $0x38] sm:$0xff]
    %v77 = vld [vmem:[%s0 + $0x40] sm:$0xf]
    %v78 = vld [vmem:[%s0 + $0x48] sm:$0xf]
    %v79 = vld [vmem:[%s1] sm:$0xff]
    %v80 = vld [vmem:[%s1 + $0x8] sm:$0xff]
    %v81 = vld [vmem:[%s1 + $0x10] sm:$0xff]
    %v82 = vld [vmem:[%s1 + $0x18] sm:$0xff]
    %v83 = vld [vmem:[%s1 + $0x20] sm:$0xff]
    %v84 = vld [vmem:[%s1 + $0x28] sm:$0xff]
    %v85 = vld [vmem:[%s1 + $0x30] sm:$0xff]
    %v86 = vld [vmem:[%s1 + $0x38] sm:$0xff]
    %88 = vset.pattern.permute.xlu0 0
    %89 = vperm.xlu0 %88, %v41
    %v90 = vpop.permute.xlu0 %89
    %93 = vset.pattern.permute.xlu0 0
    %94 = vperm.xlu0 %93, %v42
    %v95 = vpop.permute.xlu0 %94
    %98 = vset.pattern.permute.xlu0 0
    %99 = vperm.xlu0 %98, %v43
    %v100 = vpop.permute.xlu0 %99
    %103 = vset.pattern.permute.xlu0 0
    %104 = vperm.xlu0 %103, %v44
    %v105 = vpop.permute.xlu0 %104
    %108 = vset.pattern.permute.xlu0 0
    %109 = vperm.xlu0 %108, %v45
    %v110 = vpop.permute.xlu0 %109
    %113 = vset.pattern.permute.xlu0 0
    %114 = vperm.xlu0 %113, %v46
    %v115 = vpop.permute.xlu0 %114
    %118 = vset.pattern.permute.xlu0 0
    %119 = vperm.xlu0 %118, %v47
    %v120 = vpop.permute.xlu0 %119
    %123 = vset.pattern.permute.xlu0 0
    %124 = vperm.xlu0 %123, %v48
    %v125 = vpop.permute.xlu0 %124
    %vm127 = vcmask 293888
    %v129 = vsel %vm127, %v33, 0
    %v132 = vsel %vm127, %v34, 0
    %v135 = vsel %vm127, %v35, 0
    %v138 = vsel %vm127, %v36, 0
    %v141 = vsel %vm127, %v37, 0
    %v144 = vsel %vm127, %v38, 0
    %v147 = vsel %vm127, %v39, 0
    %v150 = vsel %vm127, %v40, 0
    %vm152 = vcmask 1043456
    %v154 = vsel %vm152, %v77, 0
    %v157 = vsel %vm152, %v78, 0
    %159 = vmatprep.subr.mxu0 %v70
    %160 = vmatpush1.msra.mxu0 %v69
    %161 = vmatprep.subr.mxu0 %v72
    %162 = vmatpush1.msra.mxu0 %v71
    %163 = vmatprep.subr.mxu0 %v74
    %164 = vmatpush1.msra.mxu0 %v73
    %165 = vmatprep.subr.mxu0 %v76
    %166 = vmatpush1.msra.mxu0 %v75
    %167 = vmatprep.subr.mxu0 %v157
    %168 = vmatpush1.msra.mxu0 %v154
    %169 = vmatprep.subr.mxu0 0.0
    %170 = vmatpush1.msra.mxu0 0.0
    %171 = vmatprep.subr.mxu0 0.0
    %172 = vmatpush1.msra.mxu0 0.0
    %173 = vmatprep.subr.mxu0 0.0
    %174 = vmatpush1.msra.mxu0 0.0
    %175 = vmatprep.subr.mxu0 0.0
    %176 = vmatpush1.msra.mxu0 0.0
    %177 = vmatprep.subr.mxu0 0.0
    %178 = vmatpush1.msra.mxu0 0.0
    %179 = vmatprep.subr.mxu0 0.0
    %180 = vmatpush1.msra.mxu0 0.0
    %181 = vmatprep.subr.mxu0 0.0
    %182 = vmatpush1.msra.mxu0 0.0
    %183 = vmatprep.subr.mxu0 0.0
    %184 = vmatpush1.msra.mxu0 0.0
    %185 = vmatprep.subr.mxu0 0.0
    %186 = vmatpush1.msra.mxu0 0.0
    %187 = vmatprep.subr.mxu0 0.0
    %188 = vmatpush1.msra.mxu0 0.0
    %189 = vmatprep.subr.mxu0 0.0
    %190 = vmatpush1.msra.mxu0 0.0
    %191 = vmatprep.subr.mxu0 0.0
    %192 = vmatpush1.msra.mxu0 0.0
    %193 = vmatprep.subr.mxu0 0.0
    %194 = vmatpush1.msra.mxu0 0.0
    %195 = vmatprep.subr.mxu0 0.0
    %196 = vmatpush1.msra.mxu0 0.0
    %197 = vmatprep.subr.mxu0 0.0
    %198 = vmatpush1.msra.mxu0 0.0
    %199 = vmatprep.subr.mxu0 0.0
    %200 = vmatpush1.msra.mxu0 0.0
    %201 = vmatprep.subr.mxu0 0.0
    %202 = vmatpush1.msra.mxu0 0.0
    %203 = vmatprep.subr.mxu0 0.0
    %204 = vmatpush1.msra.mxu0 0.0
    %205 = vmatprep.subr.mxu0 0.0
    %206 = vmatpush1.msra.mxu0 0.0
    %207 = vmatprep.subr.mxu0 0.0
    %208 = vmatpush1.msra.mxu0 0.0
    %209 = vmatprep.subr.mxu0 0.0
    %210 = vmatpush1.msra.mxu0 0.0
    %211 = vmatprep.subr.mxu0 0.0
    %212 = vmatpush1.msra.mxu0 0.0
    %213 = vmatprep.subr.mxu0 0.0
    %214 = vmatpush1.msra.mxu0 0.0
    %215 = vmatprep.subr.mxu0 0.0
    %216 = vmatpush1.msra.mxu0 0.0
    %217 = vmatprep.subr.mxu0 0.0
    %218 = vmatpush1.msra.mxu0 0.0
    %219 = vmatprep.subr.mxu0 0.0
    %220 = vmatpush1.msra.mxu0 0.0
    %221 = vmatprep.subr.mxu0 0.0
    %222 = vmatpush1.msra.mxu0 0.0
    %223 = vmatprep.mubr.f32.mxu0 0.0
    %224 = vmatmul.mubr.f32.gmra.mrb[0].mxu0 %v129
    %v225 = vpop.f32.mrb[0].mxu0
    %v226 = vadd.f32 %v90, %v225
    %v227 = vpop.f32.mrb[0].mxu0
    %v228 = vadd.f32 %v90, %v227
    %229 = vmatprep.mubr.f32.mxu0 0.0
    %230 = vmatmul.mubr.f32.gmra.mrb[0].mxu0 %v132
    %v231 = vpop.f32.mrb[0].mxu0
    %v232 = vadd.f32 %v95, %v231
    %v233 = vpop.f32.mrb[0].mxu0
    %v234 = vadd.f32 %v95, %v233
    %235 = vmatprep.mubr.f32.mxu0 0.0
    %236 = vmatmul.mubr.f32.gmra.mrb[0].mxu0 %v135
    %v237 = vpop.f32.mrb[0].mxu0
    %v238 = vadd.f32 %v100, %v237
    %v239 = vpop.f32.mrb[0].mxu0
    %v240 = vadd.f32 %v100, %v239
    %241 = vmatprep.mubr.f32.mxu0 0.0
    %242 = vmatmul.mubr.f32.gmra.mrb[0].mxu0 %v138
    %v243 = vpop.f32.mrb[0].mxu0
    %v244 = vadd.f32 %v105, %v243
    %v245 = vpop.f32.mrb[0].mxu0
    %v246 = vadd.f32 %v105, %v245
    %247 = vmatprep.mubr.f32.mxu0 0.0
    %248 = vmatmul.mubr.f32.gmra.mrb[0].mxu0 %v141
    %v249 = vpop.f32.mrb[0].mxu0
    %v250 = vadd.f32 %v110, %v249
    %v251 = vpop.f32.mrb[0].mxu0
    %v252 = vadd.f32 %v110, %v251
    %253 = vmatprep.mubr.f32.mxu0 0.0
    %254 = vmatmul.mubr.f32.gmra.mrb[0].mxu0 %v144
    %v255 = vpop.f32.mrb[0].mxu0
    %v256 = vadd.f32 %v115, %v255
    %v257 = vpop.f32.mrb[0].mxu0
    %v258 = vadd.f32 %v115, %v257
    %259 = vmatprep.mubr.f32.mxu0 0.0
    %260 = vmatmul.mubr.f32.gmra.mrb[0].mxu0 %v147
    %v261 = vpop.f32.mrb[0].mxu0
    %v262 = vadd.f32 %v120, %v261
    %v263 = vpop.f32.mrb[0].mxu0
    %v264 = vadd.f32 %v120, %v263
    %265 = vmatprep.mubr.f32.mxu0 0.0
    %266 = vmatmul.mubr.f32.gmra.mrb[0].mxu0 %v150
    %v267 = vpop.f32.mrb[0].mxu0
    %v268 = vadd.f32 %v125, %v267
    %v269 = vpop.f32.mrb[0].mxu0
    %v270 = vadd.f32 %v125, %v269
    %271 = vdwg.mxu0
    %273 = vset.pattern.permute.xlu0 0
    %274 = vperm.xlu0 %273, %v53
    %v275 = vpop.permute.xlu0 %274
    %278 = vset.pattern.permute.xlu0 0
    %279 = vperm.xlu0 %278, %v54
    %v280 = vpop.permute.xlu0 %279
    %283 = vset.pattern.permute.xlu0 0
    %284 = vperm.xlu0 %283, %v55
    %v285 = vpop.permute.xlu0 %284
    %288 = vset.pattern.permute.xlu0 0
    %289 = vperm.xlu0 %288, %v56
    %v290 = vpop.permute.xlu0 %289
    %vm292 = vcmask 261120
    %v294 = vsel %vm292, %v49, 0
    %v297 = vsel %vm292, %v50, 0
    %v300 = vsel %vm292, %v51, 0
    %v303 = vsel %vm292, %v52, 0
    %305 = vmatprep.subr.mxu0 %v228
    %306 = vmatpush1.msra.mxu0 %v226
    %307 = vmatprep.subr.mxu0 %v234
    %308 = vmatpush1.msra.mxu0 %v232
    %309 = vmatprep.subr.mxu0 %v240
    %310 = vmatpush1.msra.mxu0 %v238
    %311 = vmatprep.subr.mxu0 %v246
    %312 = vmatpush1.msra.mxu0 %v244
    %313 = vmatprep.subr.mxu0 0.0
    %314 = vmatpush1.msra.mxu0 0.0
    %315 = vmatprep.subr.mxu0 0.0
    %316 = vmatpush1.msra.mxu0 0.0
    %317 = vmatprep.subr.mxu0 0.0
    %318 = vmatpush1.msra.mxu0 0.0
    %319 = vmatprep.subr.mxu0 0.0
    %320 = vmatpush1.msra.mxu0 0.0
    %321 = vmatprep.subr.mxu0 0.0
    %322 = vmatpush1.msra.mxu0 0.0
    %323 = vmatprep.subr.mxu0 0.0
    %324 = vmatpush1.msra.mxu0 0.0
    %325 = vmatprep.subr.mxu0 0.0
    %326 = vmatpush1.msra.mxu0 0.0
    %327 = vmatprep.subr.mxu0 0.0
    %328 = vmatpush1.msra.mxu0 0.0
    %329 = vmatprep.subr.mxu0 0.0
    %330 = vmatpush1.msra.mxu0 0.0
    %331 = vmatprep.subr.mxu0 0.0
    %332 = vmatpush1.msra.mxu0 0.0
    %333 = vmatprep.subr.mxu0 0.0
    %334 = vmatpush1.msra.mxu0 0.0
    %335 = vmatprep.subr.mxu0 0.0
    %336 = vmatpush1.msra.mxu0 0.0
    %337 = vmatprep.subr.mxu0 0.0
    %338 = vmatpush1.msra.mxu0 0.0
    %339 = vmatprep.subr.mxu0 0.0
    %340 = vmatpush1.msra.mxu0 0.0
    %341 = vmatprep.subr.mxu0 0.0
    %342 = vmatpush1.msra.mxu0 0.0
    %343 = vmatprep.subr.mxu0 0.0
    %344 = vmatpush1.msra.mxu0 0.0
    %345 = vmatprep.subr.mxu0 0.0
    %346 = vmatpush1.msra.mxu0 0.0
    %347 = vmatprep.subr.mxu0 0.0
    %348 = vmatpush1.msra.mxu0 0.0
    %349 = vmatprep.subr.mxu0 0.0
    %350 = vmatpush1.msra.mxu0 0.0
    %351 = vmatprep.subr.mxu0 0.0
    %352 = vmatpush1.msra.mxu0 0.0
    %353 = vmatprep.subr.mxu0 0.0
    %354 = vmatpush1.msra.mxu0 0.0
    %355 = vmatprep.subr.mxu0 0.0
    %356 = vmatpush1.msra.mxu0 0.0
    %357 = vmatprep.subr.mxu0 0.0
    %358 = vmatpush1.msra.mxu0 0.0
    %359 = vmatprep.subr.mxu0 0.0
    %360 = vmatpush1.msra.mxu0 0.0
    %361 = vmatprep.subr.mxu0 0.0
    %362 = vmatpush1.msra.mxu0 0.0
    %363 = vmatprep.subr.mxu0 0.0
    %364 = vmatpush1.msra.mxu0 0.0
    %365 = vmatprep.subr.mxu0 0.0
    %366 = vmatpush1.msra.mxu0 0.0
    %367 = vmatprep.subr.mxu0 0.0
    %368 = vmatpush1.msra.mxu0 0.0
    %369 = vmatprep.mubr.f32.mxu0 0.0
    %370 = vmatmul.mubr.f32.gmra.mrb[0].mxu0 %v294
    %v371 = vpop.f32.mrb[0].mxu0
    %v372 = vadd.f32 %v275, %v371
    %v373 = vpop.f32.mrb[0].mxu0
    %v374 = vadd.f32 %v275, %v373
    %375 = vmatprep.mubr.f32.mxu0 0.0
    %376 = vmatmul.mubr.f32.gmra.mrb[0].mxu0 %v297
    %v377 = vpop.f32.mrb[0].mxu0
    %v378 = vadd.f32 %v280, %v377
    %v379 = vpop.f32.mrb[0].mxu0
    %v380 = vadd.f32 %v280, %v379
    %381 = vmatprep.mubr.f32.mxu0 0.0
    %382 = vmatmul.mubr.f32.gmra.mrb[0].mxu0 %v300
    %v383 = vpop.f32.mrb[0].mxu0
    %v384 = vadd.f32 %v285, %v383
    %v385 = vpop.f32.mrb[0].mxu0
    %v386 = vadd.f32 %v285, %v385
    %387 = vmatprep.mubr.f32.mxu0 0.0
    %388 = vmatmul.mubr.f32.gmra.mrb[0].mxu0 %v303
    %v389 = vpop.f32.mrb[0].mxu0
    %v390 = vadd.f32 %v290, %v389
    %v391 = vpop.f32.mrb[0].mxu0
    %v392 = vadd.f32 %v290, %v391
    %393 = vdwg.mxu0
    %v394 = vmax.f32 %v372, 0.0
    %v395 = vmax.f32 %v374, 0.0
    %v396 = vmax.f32 %v378, 0.0
    %v397 = vmax.f32 %v380, 0.0
    %v398 = vmax.f32 %v384, 0.0
    %v399 = vmax.f32 %v386, 0.0
    %v400 = vmax.f32 %v390, 0.0
    %v401 = vmax.f32 %v392, 0.0
    %403 = vset.pattern.permute.xlu0 0
    %404 = vperm.xlu0 %403, %v61
    %v405 = vpop.permute.xlu0 %404
    %408 = vset.pattern.permute.xlu0 0
    %409 = vperm.xlu0 %408, %v62
    %v410 = vpop.permute.xlu0 %409
    %413 = vset.pattern.permute.xlu0 0
    %414 = vperm.xlu0 %413, %v63
    %v415 = vpop.permute.xlu0 %414
    %418 = vset.pattern.permute.xlu0 0
    %419 = vperm.xlu0 %418, %v64
    %v420 = vpop.permute.xlu0 %419
    %v423 = vsel %vm292, %v57, 0
    %v426 = vsel %vm292, %v58, 0
    %v429 = vsel %vm292, %v59, 0
    %v432 = vsel %vm292, %v60, 0
    %434 = vmatprep.subr.mxu0 %v395
    %435 = vmatpush1.msra.mxu0 %v394
    %436 = vmatprep.subr.mxu0 %v397
    %437 = vmatpush1.msra.mxu0 %v396
    %438 = vmatprep.subr.mxu0 %v399
    %439 = vmatpush1.msra.mxu0 %v398
    %440 = vmatprep.subr.mxu0 %v401
    %441 = vmatpush1.msra.mxu0 %v400
    %442 = vmatprep.subr.mxu0 0.0
    %443 = vmatpush1.msra.mxu0 0.0
    %444 = vmatprep.subr.mxu0 0.0
    %445 = vmatpush1.msra.mxu0 0.0
    %446 = vmatprep.subr.mxu0 0.0
    %447 = vmatpush1.msra.mxu0 0.0
    %448 = vmatprep.subr.mxu0 0.0
    %449 = vmatpush1.msra.mxu0 0.0
    %450 = vmatprep.subr.mxu0 0.0
    %451 = vmatpush1.msra.mxu0 0.0
    %452 = vmatprep.subr.mxu0 0.0
    %453 = vmatpush1.msra.mxu0 0.0
    %454 = vmatprep.subr.mxu0 0.0
    %455 = vmatpush1.msra.mxu0 0.0
    %456 = vmatprep.subr.mxu0 0.0
    %457 = vmatpush1.msra.mxu0 0.0
    %458 = vmatprep.subr.mxu0 0.0
    %459 = vmatpush1.msra.mxu0 0.0
    %460 = vmatprep.subr.mxu0 0.0
    %461 = vmatpush1.msra.mxu0 0.0
    %462 = vmatprep.subr.mxu0 0.0
    %463 = vmatpush1.msra.mxu0 0.0
    %464 = vmatprep.subr.mxu0 0.0
    %465 = vmatpush1.msra.mxu0 0.0
    %466 = vmatprep.subr.mxu0 0.0
    %467 = vmatpush1.msra.mxu0 0.0
    %468 = vmatprep.subr.mxu0 0.0
    %469 = vmatpush1.msra.mxu0 0.0
    %470 = vmatprep.subr.mxu0 0.0
    %471 = vmatpush1.msra.mxu0 0.0
    %472 = vmatprep.subr.mxu0 0.0
    %473 = vmatpush1.msra.mxu0 0.0
    %474 = vmatprep.subr.mxu0 0.0
    %475 = vmatpush1.msra.mxu0 0.0
    %476 = vmatprep.subr.mxu0 0.0
    %477 = vmatpush1.msra.mxu0 0.0
    %478 = vmatprep.subr.mxu0 0.0
    %479 = vmatpush1.msra.mxu0 0.0
    %480 = vmatprep.subr.mxu0 0.0
    %481 = vmatpush1.msra.mxu0 0.0
    %482 = vmatprep.subr.mxu0 0.0
    %483 = vmatpush1.msra.mxu0 0.0
    %484 = vmatprep.subr.mxu0 0.0
    %485 = vmatpush1.msra.mxu0 0.0
    %486 = vmatprep.subr.mxu0 0.0
    %487 = vmatpush1.msra.mxu0 0.0
    %488 = vmatprep.subr.mxu0 0.0
    %489 = vmatpush1.msra.mxu0 0.0
    %490 = vmatprep.subr.mxu0 0.0
    %491 = vmatpush1.msra.mxu0 0.0
    %492 = vmatprep.subr.mxu0 0.0
    %493 = vmatpush1.msra.mxu0 0.0
    %494 = vmatprep.subr.mxu0 0.0
    %495 = vmatpush1.msra.mxu0 0.0
    %496 = vmatprep.subr.mxu0 0.0
    %497 = vmatpush1.msra.mxu0 0.0
    %498 = vmatprep.mubr.f32.mxu0 0.0
    %499 = vmatmul.mubr.f32.gmra.mrb[0].mxu0 %v423
    %v500 = vpop.f32.mrb[0].mxu0
    %v501 = vadd.f32 %v405, %v500
    %v502 = vpop.f32.mrb[0].mxu0
    %v503 = vadd.f32 %v405, %v502
    %504 = vmatprep.mubr.f32.mxu0 0.0
    %505 = vmatmul.mubr.f32.gmra.mrb[0].mxu0 %v426
    %v506 = vpop.f32.mrb[0].mxu0
    %v507 = vadd.f32 %v410, %v506
    %v508 = vpop.f32.mrb[0].mxu0
    %v509 = vadd.f32 %v410, %v508
    %510 = vmatprep.mubr.f32.mxu0 0.0
    %511 = vmatmul.mubr.f32.gmra.mrb[0].mxu0 %v429
    %v512 = vpop.f32.mrb[0].mxu0
    %v513 = vadd.f32 %v415, %v512
    %v514 = vpop.f32.mrb[0].mxu0
    %v515 = vadd.f32 %v415, %v514
    %516 = vmatprep.mubr.f32.mxu0 0.0
    %517 = vmatmul.mubr.f32.gmra.mrb[0].mxu0 %v432
    %v518 = vpop.f32.mrb[0].mxu0
    %v519 = vadd.f32 %v420, %v518
    %v520 = vpop.f32.mrb[0].mxu0
    %v521 = vadd.f32 %v420, %v520
    %522 = vdwg.mxu0
    %v523 = vmul.f32 %v501, %v79
    %v524 = vmul.f32 %v503, %v80
    %v525 = vmul.f32 %v507, %v81
    %v526 = vmul.f32 %v509, %v82
    %v527 = vmul.f32 %v513, %v83
    %v528 = vmul.f32 %v515, %v84
    %v529 = vmul.f32 %v519, %v85
    %v530 = vmul.f32 %v521, %v86
    %v532 = vsel %vm292, %v65, 0
    %v535 = vsel %vm292, %v66, 0
    %v538 = vsel %vm292, %v67, 0
    %v541 = vsel %vm292, %v68, 0
    %543 = vmatprep.subr.mxu0 %v524
    %544 = vmatpush1.msra.mxu0 %v523
    %545 = vmatprep.subr.mxu0 %v526
    %546 = vmatpush1.msra.mxu0 %v525
    %547 = vmatprep.subr.mxu0 %v528
    %548 = vmatpush1.msra.mxu0 %v527
    %549 = vmatprep.subr.mxu0 %v530
    %550 = vmatpush1.msra.mxu0 %v529
    %551 = vmatprep.subr.mxu0 0.0
    %552 = vmatpush1.msra.mxu0 0.0
    %553 = vmatprep.subr.mxu0 0.0
    %554 = vmatpush1.msra.mxu0 0.0
    %555 = vmatprep.subr.mxu0 0.0
    %556 = vmatpush1.msra.mxu0 0.0
    %557 = vmatprep.subr.mxu0 0.0
    %558 = vmatpush1.msra.mxu0 0.0
    %559 = vmatprep.subr.mxu0 0.0
    %560 = vmatpush1.msra.mxu0 0.0
    %561 = vmatprep.subr.mxu0 0.0
    %562 = vmatpush1.msra.mxu0 0.0
    %563 = vmatprep.subr.mxu0 0.0
    %564 = vmatpush1.msra.mxu0 0.0
    %565 = vmatprep.subr.mxu0 0.0
    %566 = vmatpush1.msra.mxu0 0.0
    %567 = vmatprep.subr.mxu0 0.0
    %568 = vmatpush1.msra.mxu0 0.0
    %569 = vmatprep.subr.mxu0 0.0
    %570 = vmatpush1.msra.mxu0 0.0
    %571 = vmatprep.subr.mxu0 0.0
    %572 = vmatpush1.msra.mxu0 0.0
    %573 = vmatprep.subr.mxu0 0.0
    %574 = vmatpush1.msra.mxu0 0.0
    %575 = vmatprep.subr.mxu0 0.0
    %576 = vmatpush1.msra.mxu0 0.0
    %577 = vmatprep.subr.mxu0 0.0
    %578 = vmatpush1.msra.mxu0 0.0
    %579 = vmatprep.subr.mxu0 0.0
    %580 = vmatpush1.msra.mxu0 0.0
    %581 = vmatprep.subr.mxu0 0.0
    %582 = vmatpush1.msra.mxu0 0.0
    %583 = vmatprep.subr.mxu0 0.0
    %584 = vmatpush1.msra.mxu0 0.0
    %585 = vmatprep.subr.mxu0 0.0
    %586 = vmatpush1.msra.mxu0 0.0
    %587 = vmatprep.subr.mxu0 0.0
    %588 = vmatpush1.msra.mxu0 0.0
    %589 = vmatprep.subr.mxu0 0.0
    %590 = vmatpush1.msra.mxu0 0.0
    %591 = vmatprep.subr.mxu0 0.0
    %592 = vmatpush1.msra.mxu0 0.0
    %593 = vmatprep.subr.mxu0 0.0
    %594 = vmatpush1.msra.mxu0 0.0
    %595 = vmatprep.subr.mxu0 0.0
    %596 = vmatpush1.msra.mxu0 0.0
    %597 = vmatprep.subr.mxu0 0.0
    %598 = vmatpush1.msra.mxu0 0.0
    %599 = vmatprep.subr.mxu0 0.0
    %600 = vmatpush1.msra.mxu0 0.0
    %601 = vmatprep.subr.mxu0 0.0
    %602 = vmatpush1.msra.mxu0 0.0
    %603 = vmatprep.subr.mxu0 0.0
    %604 = vmatpush1.msra.mxu0 0.0
    %605 = vmatprep.subr.mxu0 0.0
    %606 = vmatpush1.msra.mxu0 0.0
    %607 = vmatprep.mubr.f32.mxu0 0.0
    %608 = vmatmul.mubr.f32.gmra.mrb[0].mxu0 %v532
    %v609 = vpop.f32.mrb[0].mxu0
    %v610 = vadd.f32 0.0, %v609
    %v611 = vpop.f32.mrb[0].mxu0
    %v612 = vadd.f32 0.0, %v611
    %613 = vmatprep.mubr.f32.mxu0 0.0
    %614 = vmatmul.mubr.f32.gmra.mrb[0].mxu0 %v535
    %v615 = vpop.f32.mrb[0].mxu0
    %v616 = vadd.f32 0.0, %v615
    %v617 = vpop.f32.mrb[0].mxu0
    %v618 = vadd.f32 0.0, %v617
    %619 = vmatprep.mubr.f32.mxu0 0.0
    %620 = vmatmul.mubr.f32.gmra.mrb[0].mxu0 %v538
    %v621 = vpop.f32.mrb[0].mxu0
    %v622 = vadd.f32 0.0, %v621
    %v623 = vpop.f32.mrb[0].mxu0
    %v624 = vadd.f32 0.0, %v623
    %625 = vmatprep.mubr.f32.mxu0 0.0
    %626 = vmatmul.mubr.f32.gmra.mrb[0].mxu0 %v541
    %v627 = vpop.f32.mrb[0].mxu0
    %v628 = vadd.f32 0.0, %v627
    %v629 = vpop.f32.mrb[0].mxu0
    %v630 = vadd.f32 0.0, %v629
    %631 = vdwg.mxu0
    %v632 = vadd.f32 %v250, %v610
    %v633 = vadd.f32 %v252, %v612
    %v634 = vadd.f32 %v256, %v616
    %v635 = vadd.f32 %v258, %v618
    %v636 = vadd.f32 %v262, %v622
    %v637 = vadd.f32 %v264, %v624
    %v638 = vadd.f32 %v268, %v628
    %v639 = vadd.f32 %v270, %v630
    %v640 = vadd.f32 %v632, %v79
    %v641 = vadd.f32 %v633, %v80
    %v642 = vadd.f32 %v634, %v81
    %v643 = vadd.f32 %v635, %v82
    %v644 = vadd.f32 %v636, %v83
    %v645 = vadd.f32 %v637, %v84
    %v646 = vadd.f32 %v638, %v85
    %v647 = vadd.f32 %v639, %v86
    %648 = vst [vmem:[#allocation2] sm:$0xff] %v640
    %649 = vst [vmem:[#allocation2 + $0x8] sm:$0xff] %v641
    %650 = vst [vmem:[#allocation2 + $0x10] sm:$0xff] %v642
    %651 = vst [vmem:[#allocation2 + $0x18] sm:$0xff] %v643
    %652 = vst [vmem:[#allocation2 + $0x20] sm:$0xff] %v644
    %653 = vst [vmem:[#allocation2 + $0x28] sm:$0xff] %v645
    %654 = vst [vmem:[#allocation2 + $0x30] sm:$0xff] %v646
    %655 = vst [vmem:[#allocation2 + $0x38] sm:$0xff] %v647
    %s656 = scalar_lea.vmem %s0, 80
    %v657 = vld [vmem:[%s656] sm:$0xff]
    %v658 = vld [vmem:[%s656 + $0x8] sm:$0xff]
    %v659 = vld [vmem:[%s656 + $0x10] sm:$0xff]
    %v660 = vld [vmem:[%s656 + $0x18] sm:$0xff]
    %v661 = vld [vmem:[%s656 + $0x20] sm:$0xff]
    %v662 = vld [vmem:[%s656 + $0x28] sm:$0xff]
    %v663 = vld [vmem:[%s656 + $0x30] sm:$0xff]
    %v664 = vld [vmem:[%s656 + $0x38] sm:$0xff]
    %v665 = vld [vmem:[%s656 + $0x40] sm:$0xf]
    %v666 = vld [vmem:[%s656 + $0x48] sm:$0xf]
    %s667 = scalar_lea.vmem %s1, 64
    %v668 = vld [vmem:[%s667] sm:$0xff]
    %v669 = vld [vmem:[%s667 + $0x8] sm:$0xff]
    %v670 = vld [vmem:[%s667 + $0x10] sm:$0xff]
    %v671 = vld [vmem:[%s667 + $0x18] sm:$0xff]
    %v672 = vld [vmem:[%s667 + $0x20] sm:$0xff]
    %v673 = vld [vmem:[%s667 + $0x28] sm:$0xff]
    %v674 = vld [vmem:[%s667 + $0x30] sm:$0xff]
    %v675 = vld [vmem:[%s667 + $0x38] sm:$0xff]
    %v677 = vsel %vm152, %v665, 0
    %v680 = vsel %vm152, %v666, 0
    %682 = vmatprep.subr.mxu0 %v658
    %683 = vmatpush1.msra.mxu0 %v657
    %684 = vmatprep.subr.mxu0 %v660
    %685 = vmatpush1.msra.mxu0 %v659
    %686 = vmatprep.subr.mxu0 %v662
    %687 = vmatpush1.msra.mxu0 %v661
    %688 = vmatprep.subr.mxu0 %v664
    %689 = vmatpush1.msra.mxu0 %v663
    %690 = vmatprep.subr.mxu0 %v680
    %691 = vmatpush1.msra.mxu0 %v677
    %692 = vmatprep.subr.mxu0 0.0
    %693 = vmatpush1.msra.mxu0 0.0
    %694 = vmatprep.subr.mxu0 0.0
    %695 = vmatpush1.msra.mxu0 0.0
    %696 = vmatprep.subr.mxu0 0.0
    %697 = vmatpush1.msra.mxu0 0.0
    %698 = vmatprep.subr.mxu0 0.0
    %699 = vmatpush1.msra.mxu0 0.0
    %700 = vmatprep.subr.mxu0 0.0
    %701 = vmatpush1.msra.mxu0 0.0
    %702 = vmatprep.subr.mxu0 0.0
    %703 = vmatpush1.msra.mxu0 0.0
    %704 = vmatprep.subr.mxu0 0.0
    %705 = vmatpush1.msra.mxu0 0.0
    %706 = vmatprep.subr.mxu0 0.0
    %707 = vmatpush1.msra.mxu0 0.0
    %708 = vmatprep.subr.mxu0 0.0
    %709 = vmatpush1.msra.mxu0 0.0
    %710 = vmatprep.subr.mxu0 0.0
    %711 = vmatpush1.msra.mxu0 0.0
    %712 = vmatprep.subr.mxu0 0.0
    %713 = vmatpush1.msra.mxu0 0.0
    %714 = vmatprep.subr.mxu0 0.0
    %715 = vmatpush1.msra.mxu0 0.0
    %716 = vmatprep.subr.mxu0 0.0
    %717 = vmatpush1.msra.mxu0 0.0
    %718 = vmatprep.subr.mxu0 0.0
    %719 = vmatpush1.msra.mxu0 0.0
    %720 = vmatprep.subr.mxu0 0.0
    %721 = vmatpush1.msra.mxu0 0.0
    %722 = vmatprep.subr.mxu0 0.0
    %723 = vmatpush1.msra.mxu0 0.0
    %724 = vmatprep.subr.mxu0 0.0
    %725 = vmatpush1.msra.mxu0 0.0
    %726 = vmatprep.subr.mxu0 0.0
    %727 = vmatpush1.msra.mxu0 0.0
    %728 = vmatprep.subr.mxu0 0.0
    %729 = vmatpush1.msra.mxu0 0.0
    %730 = vmatprep.subr.mxu0 0.0
    %731 = vmatpush1.msra.mxu0 0.0
    %732 = vmatprep.subr.mxu0 0.0
    %733 = vmatpush1.msra.mxu0 0.0
    %734 = vmatprep.subr.mxu0 0.0
    %735 = vmatpush1.msra.mxu0 0.0
    %736 = vmatprep.subr.mxu0 0.0
    %737 = vmatpush1.msra.mxu0 0.0
    %738 = vmatprep.subr.mxu0 0.0
    %739 = vmatpush1.msra.mxu0 0.0
    %740 = vmatprep.subr.mxu0 0.0
    %741 = vmatpush1.msra.mxu0 0.0
    %742 = vmatprep.subr.mxu0 0.0
    %743 = vmatpush1.msra.mxu0 0.0
    %744 = vmatprep.subr.mxu0 0.0
    %745 = vmatpush1.msra.mxu0 0.0
    %746 = vmatprep.mubr.f32.mxu0 0.0
    %747 = vmatmul.mubr.f32.gmra.mrb[0].mxu0 %v129
    %v748 = vpop.f32.mrb[0].mxu0
    %v749 = vadd.f32 %v90, %v748
    %v750 = vpop.f32.mrb[0].mxu0
    %v751 = vadd.f32 %v90, %v750
    %752 = vmatprep.mubr.f32.mxu0 0.0
    %753 = vmatmul.mubr.f32.gmra.mrb[0].mxu0 %v132
    %v754 = vpop.f32.mrb[0].mxu0
    %v755 = vadd.f32 %v95, %v754
    %v756 = vpop.f32.mrb[0].mxu0
    %v757 = vadd.f32 %v95, %v756
    %758 = vmatprep.mubr.f32.mxu0 0.0
    %759 = vmatmul.mubr.f32.gmra.mrb[0].mxu0 %v135
    %v760 = vpop.f32.mrb[0].mxu0
    %v761 = vadd.f32 %v100, %v760
    %v762 = vpop.f32.mrb[0].mxu0
    %v763 = vadd.f32 %v100, %v762
    %764 = vmatprep.mubr.f32.mxu0 0.0
    %765 = vmatmul.mubr.f32.gmra.mrb[0].mxu0 %v138
    %v766 = vpop.f32.mrb[0].mxu0
    %v767 = vadd.f32 %v105, %v766
    %v768 = vpop.f32.mrb[0].mxu0
    %v769 = vadd.f32 %v105, %v768
    %770 = vmatprep.mubr.f32.mxu0 0.0
    %771 = vmatmul.mubr.f32.gmra.mrb[0].mxu0 %v141
    %v772 = vpop.f32.mrb[0].mxu0
    %v773 = vadd.f32 %v110, %v772
    %v774 = vpop.f32.mrb[0].mxu0
    %v775 = vadd.f32 %v110, %v774
    %776 = vmatprep.mubr.f32.mxu0 0.0
    %777 = vmatmul.mubr.f32.gmra.mrb[0].mxu0 %v144
    %v778 = vpop.f32.mrb[0].mxu0
    %v779 = vadd.f32 %v115, %v778
    %v780 = vpop.f32.mrb[0].mxu0
    %v781 = vadd.f32 %v115, %v780
    %782 = vmatprep.mubr.f32.mxu0 0.0
    %783 = vmatmul.mubr.f32.gmra.mrb[0].mxu0 %v147
    %v784 = vpop.f32.mrb[0].mxu0
    %v785 = vadd.f32 %v120, %v784
    %v786 = vpop.f32.mrb[0].mxu0
    %v787 = vadd.f32 %v120, %v786
    %788 = vmatprep.mubr.f32.mxu0 0.0
    %789 = vmatmul.mubr.f32.gmra.mrb[0].mxu0 %v150
    %v790 = vpop.f32.mrb[0].mxu0
    %v791 = vadd.f32 %v125, %v790
    %v792 = vpop.f32.mrb[0].mxu0
    %v793 = vadd.f32 %v125, %v792
    %794 = vdwg.mxu0
    %795 = vmatprep.subr.mxu0 %v751
    %796 = vmatpush1.msra.mxu0 %v749
    %797 = vmatprep.subr.mxu0 %v757
    %798 = vmatpush1.msra.mxu0 %v755
    %799 = vmatprep.subr.mxu0 %v763
    %800 = vmatpush1.msra.mxu0 %v761
    %801 = vmatprep.subr.mxu0 %v769
    %802 = vmatpush1.msra.mxu0 %v767
    %803 = vmatprep.subr.mxu0 0.0
    %804 = vmatpush1.msra.mxu0 0.0
    %805 = vmatprep.subr.mxu0 0.0
    %806 = vmatpush1.msra.mxu0 0.0
    %807 = vmatprep.subr.mxu0 0.0
    %808 = vmatpush1.msra.mxu0 0.0
    %809 = vmatprep.subr.mxu0 0.0
    %810 = vmatpush1.msra.mxu0 0.0
    %811 = vmatprep.subr.mxu0 0.0
    %812 = vmatpush1.msra.mxu0 0.0
    %813 = vmatprep.subr.mxu0 0.0
    %814 = vmatpush1.msra.mxu0 0.0
    %815 = vmatprep.subr.mxu0 0.0
    %816 = vmatpush1.msra.mxu0 0.0
    %817 = vmatprep.subr.mxu0 0.0
    %818 = vmatpush1.msra.mxu0 0.0
    %819 = vmatprep.subr.mxu0 0.0
    %820 = vmatpush1.msra.mxu0 0.0
    %821 = vmatprep.subr.mxu0 0.0
    %822 = vmatpush1.msra.mxu0 0.0
    %823 = vmatprep.subr.mxu0 0.0
    %824 = vmatpush1.msra.mxu0 0.0
    %825 = vmatprep.subr.mxu0 0.0
    %826 = vmatpush1.msra.mxu0 0.0
    %827 = vmatprep.subr.mxu0 0.0
    %828 = vmatpush1.msra.mxu0 0.0
    %829 = vmatprep.subr.mxu0 0.0
    %830 = vmatpush1.msra.mxu0 0.0
    %831 = vmatprep.subr.mxu0 0.0
    %832 = vmatpush1.msra.mxu0 0.0
    %833 = vmatprep.subr.mxu0 0.0
    %834 = vmatpush1.msra.mxu0 0.0
    %835 = vmatprep.subr.mxu0 0.0
    %836 = vmatpush1.msra.mxu0 0.0
    %837 = vmatprep.subr.mxu0 0.0
    %838 = vmatpush1.msra.mxu0 0.0
    %839 = vmatprep.subr.mxu0 0.0
    %840 = vmatpush1.msra.mxu0 0.0
    %841 = vmatprep.subr.mxu0 0.0
    %842 = vmatpush1.msra.mxu0 0.0
    %843 = vmatprep.subr.mxu0 0.0
    %844 = vmatpush1.msra.mxu0 0.0
    %845 = vmatprep.subr.mxu0 0.0
    %846 = vmatpush1.msra.mxu0 0.0
    %847 = vmatprep.subr.mxu0 0.0
    %848 = vmatpush1.msra.mxu0 0.0
    %849 = vmatprep.subr.mxu0 0.0
    %850 = vmatpush1.msra.mxu0 0.0
    %851 = vmatprep.subr.mxu0 0.0
    %852 = vmatpush1.msra.mxu0 0.0
    %853 = vmatprep.subr.mxu0 0.0
    %854 = vmatpush1.msra.mxu0 0.0
    %855 = vmatprep.subr.mxu0 0.0
    %856 = vmatpush1.msra.mxu0 0.0
    %857 = vmatprep.subr.mxu0 0.0
    %858 = vmatpush1.msra.mxu0 0.0
    %859 = vmatprep.mubr.f32.mxu0 0.0
    %860 = vmatmul.mubr.f32.gmra.mrb[0].mxu0 %v294
    %v861 = vpop.f32.mrb[0].mxu0
    %v862 = vadd.f32 %v275, %v861
    %v863 = vpop.f32.mrb[0].mxu0
    %v864 = vadd.f32 %v275, %v863
    %865 = vmatprep.mubr.f32.mxu0 0.0
    %866 = vmatmul.mubr.f32.gmra.mrb[0].mxu0 %v297
    %v867 = vpop.f32.mrb[0].mxu0
    %v868 = vadd.f32 %v280, %v867
    %v869 = vpop.f32.mrb[0].mxu0
    %v870 = vadd.f32 %v280, %v869
    %871 = vmatprep.mubr.f32.mxu0 0.0
    %872 = vmatmul.mubr.f32.gmra.mrb[0].mxu0 %v300
    %v873 = vpop.f32.mrb[0].mxu0
    %v874 = vadd.f32 %v285, %v873
    %v875 = vpop.f32.mrb[0].mxu0
    %v876 = vadd.f32 %v285, %v875
    %877 = vmatprep.mubr.f32.mxu0 0.0
    %878 = vmatmul.mubr.f32.gmra.mrb[0].mxu0 %v303
    %v879 = vpop.f32.mrb[0].mxu0
    %v880 = vadd.f32 %v290, %v879
    %v881 = vpop.f32.mrb[0].mxu0
    %v882 = vadd.f32 %v290, %v881
    %883 = vdwg.mxu0
    %v884 = vmax.f32 %v862, 0.0
    %v885 = vmax.f32 %v864, 0.0
    %v886 = vmax.f32 %v868, 0.0
    %v887 = vmax.f32 %v870, 0.0
    %v888 = vmax.f32 %v874, 0.0
    %v889 = vmax.f32 %v876, 0.0
    %v890 = vmax.f32 %v880, 0.0
    %v891 = vmax.f32 %v882, 0.0
    %892 = vmatprep.subr.mxu0 %v885
    %893 = vmatpush1.msra.mxu0 %v884
    %894 = vmatprep.subr.mxu0 %v887
    %895 = vmatpush1.msra.mxu0 %v886
    %896 = vmatprep.subr.mxu0 %v889
    %897 = vmatpush1.msra.mxu0 %v888
    %898 = vmatprep.subr.mxu0 %v891
    %899 = vmatpush1.msra.mxu0 %v890
    %900 = vmatprep.subr.mxu0 0.0
    %901 = vmatpush1.msra.mxu0 0.0
    %902 = vmatprep.subr.mxu0 0.0
    %903 = vmatpush1.msra.mxu0 0.0
    %904 = vmatprep.subr.mxu0 0.0
    %905 = vmatpush1.msra.mxu0 0.0
    %906 = vmatprep.subr.mxu0 0.0
    %907 = vmatpush1.msra.mxu0 0.0
    %908 = vmatprep.subr.mxu0 0.0
    %909 = vmatpush1.msra.mxu0 0.0
    %910 = vmatprep.subr.mxu0 0.0
    %911 = vmatpush1.msra.mxu0 0.0
    %912 = vmatprep.subr.mxu0 0.0
    %913 = vmatpush1.msra.mxu0 0.0
    %914 = vmatprep.subr.mxu0 0.0
    %915 = vmatpush1.msra.mxu0 0.0
    %916 = vmatprep.subr.mxu0 0.0
    %917 = vmatpush1.msra.mxu0 0.0
    %918 = vmatprep.subr.mxu0 0.0
    %919 = vmatpush1.msra.mxu0 0.0
    %920 = vmatprep.subr.mxu0 0.0
    %921 = vmatpush1.msra.mxu0 0.0
    %922 = vmatprep.subr.mxu0 0.0
    %923 = vmatpush1.msra.mxu0 0.0
    %924 = vmatprep.subr.mxu0 0.0
    %925 = vmatpush1.msra.mxu0 0.0
    %926 = vmatprep.subr.mxu0 0.0
    %927 = vmatpush1.msra.mxu0 0.0
    %928 = vmatprep.subr.mxu0 0.0
    %929 = vmatpush1.msra.mxu0 0.0
    %930 = vmatprep.subr.mxu0 0.0
    %931 = vmatpush1.msra.mxu0 0.0
    %932 = vmatprep.subr.mxu0 0.0
    %933 = vmatpush1.msra.mxu0 0.0
    %934 = vmatprep.subr.mxu0 0.0
    %935 = vmatpush1.msra.mxu0 0.0
    %936 = vmatprep.subr.mxu0 0.0
    %937 = vmatpush1.msra.mxu0 0.0
    %938 = vmatprep.subr.mxu0 0.0
    %939 = vmatpush1.msra.mxu0 0.0
    %940 = vmatprep.subr.mxu0 0.0
    %941 = vmatpush1.msra.mxu0 0.0
    %942 = vmatprep.subr.mxu0 0.0
    %943 = vmatpush1.msra.mxu0 0.0
    %944 = vmatprep.subr.mxu0 0.0
    %945 = vmatpush1.msra.mxu0 0.0
    %946 = vmatprep.subr.mxu0 0.0
    %947 = vmatpush1.msra.mxu0 0.0
    %948 = vmatprep.subr.mxu0 0.0
    %949 = vmatpush1.msra.mxu0 0.0
    %950 = vmatprep.subr.mxu0 0.0
    %951 = vmatpush1.msra.mxu0 0.0
    %952 = vmatprep.subr.mxu0 0.0
    %953 = vmatpush1.msra.mxu0 0.0
    %954 = vmatprep.subr.mxu0 0.0
    %955 = vmatpush1.msra.mxu0 0.0
    %956 = vmatprep.mubr.f32.mxu0 0.0
    %957 = vmatmul.mubr.f32.gmra.mrb[0].mxu0 %v423
    %v958 = vpop.f32.mrb[0].mxu0
    %v959 = vadd.f32 %v405, %v958
    %v960 = vpop.f32.mrb[0].mxu0
    %v961 = vadd.f32 %v405, %v960
    %962 = vmatprep.mubr.f32.mxu0 0.0
    %963 = vmatmul.mubr.f32.gmra.mrb[0].mxu0 %v426
    %v964 = vpop.f32.mrb[0].mxu0
    %v965 = vadd.f32 %v410, %v964
    %v966 = vpop.f32.mrb[0].mxu0
    %v967 = vadd.f32 %v410, %v966
    %968 = vmatprep.mubr.f32.mxu0 0.0
    %969 = vmatmul.mubr.f32.gmra.mrb[0].mxu0 %v429
    %v970 = vpop.f32.mrb[0].mxu0
    %v971 = vadd.f32 %v415, %v970
    %v972 = vpop.f32.mrb[0].mxu0
    %v973 = vadd.f32 %v415, %v972
    %974 = vmatprep.mubr.f32.mxu0 0.0
    %975 = vmatmul.mubr.f32.gmra.mrb[0].mxu0 %v432
    %v976 = vpop.f32.mrb[0].mxu0
    %v977 = vadd.f32 %v420, %v976
    %v978 = vpop.f32.mrb[0].mxu0
    %v979 = vadd.f32 %v420, %v978
    %980 = vdwg.mxu0
    %v981 = vmul.f32 %v959, %v668
    %v982 = vmul.f32 %v961, %v669
    %v983 = vmul.f32 %v965, %v670
    %v984 = vmul.f32 %v967, %v671
    %v985 = vmul.f32 %v971, %v672
    %v986 = vmul.f32 %v973, %v673
    %v987 = vmul.f32 %v977, %v674
    %v988 = vmul.f32 %v979, %v675
    %989 = vmatprep.subr.mxu0 %v982
    %990 = vmatpush1.msra.mxu0 %v981
    %991 = vmatprep.subr.mxu0 %v984
    %992 = vmatpush1.msra.mxu0 %v983
    %993 = vmatprep.subr.mxu0 %v986
    %994 = vmatpush1.msra.mxu0 %v985
    %995 = vmatprep.subr.mxu0 %v988
    %996 = vmatpush1.msra.mxu0 %v987
    %997 = vmatprep.subr.mxu0 0.0
    %998 = vmatpush1.msra.mxu0 0.0
    %999 = vmatprep.subr.mxu0 0.0
    %1000 = vmatpush1.msra.mxu0 0.0
    %1001 = vmatprep.subr.mxu0 0.0
    %1002 = vmatpush1.msra.mxu0 0.0
    %1003 = vmatprep.subr.mxu0 0.0
    %1004 = vmatpush1.msra.mxu0 0.0
    %1005 = vmatprep.subr.mxu0 0.0
    %1006 = vmatpush1.msra.mxu0 0.0
    %1007 = vmatprep.subr.mxu0 0.0
    %1008 = vmatpush1.msra.mxu0 0.0
    %1009 = vmatprep.subr.mxu0 0.0
    %1010 = vmatpush1.msra.mxu0 0.0
    %1011 = vmatprep.subr.mxu0 0.0
    %1012 = vmatpush1.msra.mxu0 0.0
    %1013 = vmatprep.subr.mxu0 0.0
    %1014 = vmatpush1.msra.mxu0 0.0
    %1015 = vmatprep.subr.mxu0 0.0
    %1016 = vmatpush1.msra.mxu0 0.0
    %1017 = vmatprep.subr.mxu0 0.0
    %1018 = vmatpush1.msra.mxu0 0.0
    %1019 = vmatprep.subr.mxu0 0.0
    %1020 = vmatpush1.msra.mxu0 0.0
    %1021 = vmatprep.subr.mxu0 0.0
    %1022 = vmatpush1.msra.mxu0 0.0
    %1023 = vmatprep.subr.mxu0 0.0
    %1024 = vmatpush1.msra.mxu0 0.0
    %1025 = vmatprep.subr.mxu0 0.0
    %1026 = vmatpush1.msra.mxu0 0.0
    %1027 = vmatprep.subr.mxu0 0.0
    %1028 = vmatpush1.msra.mxu0 0.0
    %1029 = vmatprep.subr.mxu0 0.0
    %1030 = vmatpush1.msra.mxu0 0.0
    %1031 = vmatprep.subr.mxu0 0.0
    %1032 = vmatpush1.msra.mxu0 0.0
    %1033 = vmatprep.subr.mxu0 0.0
    %1034 = vmatpush1.msra.mxu0 0.0
    %1035 = vmatprep.subr.mxu0 0.0
    %1036 = vmatpush1.msra.mxu0 0.0
    %1037 = vmatprep.subr.mxu0 0.0
    %1038 = vmatpush1.msra.mxu0 0.0
    %1039 = vmatprep.subr.mxu0 0.0
    %1040 = vmatpush1.msra.mxu0 0.0
    %1041 = vmatprep.subr.mxu0 0.0
    %1042 = vmatpush1.msra.mxu0 0.0
    %1043 = vmatprep.subr.mxu0 0.0
    %1044 = vmatpush1.msra.mxu0 0.0
    %1045 = vmatprep.subr.mxu0 0.0
    %1046 = vmatpush1.msra.mxu0 0.0
    %1047 = vmatprep.subr.mxu0 0.0
    %1048 = vmatpush1.msra.mxu0 0.0
    %1049 = vmatprep.subr.mxu0 0.0
    %1050 = vmatpush1.msra.mxu0 0.0
    %1051 = vmatprep.subr.mxu0 0.0
    %1052 = vmatpush1.msra.mxu0 0.0
    %1053 = vmatprep.mubr.f32.mxu0 0.0
    %1054 = vmatmul.mubr.f32.gmra.mrb[0].mxu0 %v532
    %v1055 = vpop.f32.mrb[0].mxu0
    %v1056 = vadd.f32 0.0, %v1055
    %v1057 = vpop.f32.mrb[0].mxu0
    %v1058 = vadd.f32 0.0, %v1057
    %1059 = vmatprep.mubr.f32.mxu0 0.0
    %1060 = vmatmul.mubr.f32.gmra.mrb[0].mxu0 %v535
    %v1061 = vpop.f32.mrb[0].mxu0
    %v1062 = vadd.f32 0.0, %v1061
    %v1063 = vpop.f32.mrb[0].mxu0
    %v1064 = vadd.f32 0.0, %v1063
    %1065 = vmatprep.mubr.f32.mxu0 0.0
    %1066 = vmatmul.mubr.f32.gmra.mrb[0].mxu0 %v538
    %v1067 = vpop.f32.mrb[0].mxu0
    %v1068 = vadd.f32 0.0, %v1067
    %v1069 = vpop.f32.mrb[0].mxu0
    %v1070 = vadd.f32 0.0, %v1069
    %1071 = vmatprep.mubr.f32.mxu0 0.0
    %1072 = vmatmul.mubr.f32.gmra.mrb[0].mxu0 %v541
    %v1073 = vpop.f32.mrb[0].mxu0
    %v1074 = vadd.f32 0.0, %v1073
    %v1075 = vpop.f32.mrb[0].mxu0
    %v1076 = vadd.f32 0.0, %v1075
    %1077 = vdwg.mxu0
    %v1078 = vadd.f32 %v773, %v1056
    %v1079 = vadd.f32 %v775, %v1058
    %v1080 = vadd.f32 %v779, %v1062
    %v1081 = vadd.f32 %v781, %v1064
    %v1082 = vadd.f32 %v785, %v1068
    %v1083 = vadd.f32 %v787, %v1070
    %v1084 = vadd.f32 %v791, %v1074
    %v1085 = vadd.f32 %v793, %v1076
    %v1086 = vadd.f32 %v1078, %v668
    %v1087 = vadd.f32 %v1079, %v669
    %v1088 = vadd.f32 %v1080, %v670
    %v1089 = vadd.f32 %v1081, %v671
    %v1090 = vadd.f32 %v1082, %v672
    %v1091 = vadd.f32 %v1083, %v673
    %v1092 = vadd.f32 %v1084, %v674
    %v1093 = vadd.f32 %v1085, %v675
    %s1094 = scalar_lea.vmem [#allocation2], 64
    %1095 = vst [vmem:[%s1094] sm:$0xff] %v1086
    %1096 = vst [vmem:[%s1094 + $0x8] sm:$0xff] %v1087
    %1097 = vst [vmem:[%s1094 + $0x10] sm:$0xff] %v1088
    %1098 = vst [vmem:[%s1094 + $0x18] sm:$0xff] %v1089
    %1099 = vst [vmem:[%s1094 + $0x20] sm:$0xff] %v1090
    %1100 = vst [vmem:[%s1094 + $0x28] sm:$0xff] %v1091
    %1101 = vst [vmem:[%s1094 + $0x30] sm:$0xff] %v1092
    %1102 = vst [vmem:[%s1094 + $0x38] sm:$0xff] %v1093
    // Predicated region
    $region38: #{tpu_custom_call.1} parent=1 // pred_check
      _
    $region39: #{tpu_custom_call.1} parent=1 // pred_check_branch
      %1104 = sbr.rel (0) target = $region41
    $region40: #{tpu_custom_call.1} parent=1 // pred_region
      %s1106 = ssub.s32 2048, 2048
      %1107 = vsyncadd [#allocation3], %s1106
      %s1108 = sshll.u32 [#allocation2], 4
      %s1109 = int_to_ptr.vmem [resolvable:$true] %s1108
      %1114 = dma.vmem_to_hbm [thread:$0]  %s1109, 2048, %s9, [#allocation3], 256, 256, 16
    $region41: #{tpu_custom_call.1} parent=1 // pred_fallthru
      _
    // Predicated region
    $region42: #{tpu_custom_call.1} parent=1 // pred_check
      _
    $region43: #{tpu_custom_call.1} parent=1 // pred_check_branch
      %1116 = sbr.rel (0) target = $region45
    $region44: #{tpu_custom_call.1} parent=1 // pred_region
      %1117 = dma.done [#allocation3], 2048
    $region45: #{tpu_custom_call.1} parent=1 // pred_fallthru
      _
    %1118 = vsyncpa [#allocation3], 1

</llo_original>
